<compile_context>
chip_gen: v5e
topology: v5e:2x2
jax: 0.10.0
libtpu: 0.0.40
codegen_flags: <defaults>
</compile_context>

<pallas_src>
import jax
import jax.numpy as jnp
import numpy as np
from jax.experimental import pallas as pl
from jax.experimental.pallas import tpu as pltpu


def _const_input_kernel(p_ref, o_ref):
    # p_ref: (1, D)      -- flattened constant parameter (same tile every grid step)
    # o_ref: (B_blk, D)  -- output slab: B_blk batch rows, lane-dense along D
    o_ref[...] = jnp.broadcast_to(p_ref[...], o_ref.shape)


def constant_input_pallas(param, batch, *, vmem_tile_bytes=4 << 20):
    """out[b, c, h, w] = param[0, c, h, w] for b in range(batch)."""
    _, c, h, w = param.shape
    d = c * h * w
    p2d = param.reshape(1, d)
    itemsize = jnp.dtype(param.dtype).itemsize

    # Pick a batch tile: whole batch if it comfortably fits a VMEM tile, otherwise a
    # multiple of 8 rows (sublane-aligned) so the BlockSpec stays (8,128)-friendly.
    if batch * d * itemsize <= vmem_tile_bytes:
        block_b = batch
    else:
        block_b = max(8, ((vmem_tile_bytes // (d * itemsize)) // 8) * 8)
        block_b = min(block_b, batch)
    grid_b = pl.cdiv(batch, block_b)

    out = pl.pallas_call(
        _const_input_kernel,
        out_shape=jax.ShapeDtypeStruct((batch, d), param.dtype),
        grid=(grid_b,),
        in_specs=[pl.BlockSpec((1, d), lambda i: (0, 0))],          # same param tile each step
        out_specs=pl.BlockSpec((block_b, d), lambda i: (i, 0)),      # batch slab i
        compiler_params=pltpu.CompilerParams(dimension_semantics=("parallel",)),
    )(p2d)

    return out.reshape(batch, c, h, w)


class ConstantInput:
    """Mirror of the PyTorch module: learned constant broadcast across the batch."""

    def __init__(self, channel, size=4, *, key=None, dtype=jnp.float32):
        if key is None:
            key = jax.random.PRNGKey(0)
        # nn.Parameter(torch.randn(1, channel, size, size))
        self.input = jax.random.normal(key, (1, channel, size, size), dtype=dtype)

    def __call__(self, x):
        batch = x.shape[0]          # only the batch size of `x` is used, never its values
        return constant_input_pallas(self.input, batch)


if __name__ == "__main__":
    key = jax.random.PRNGKey(0)
    k_param, k_x, k_param2 = jax.random.split(key, 3)

    # Small shapes consistent with the module: ConstantInput(channel=4, size=4), batch=2.
    channel, size, batch = 4, 4, 2
    mod = ConstantInput(channel, size=size, key=k_param)
    x = jax.random.normal(k_x, (batch, 32), dtype=jnp.float32)   # only x.shape[0] matters

    y = jax.block_until_ready(mod(x))
    assert y.shape == (batch, channel, size, size), y.shape
    y_ref = jnp.broadcast_to(mod.input, (batch, channel, size, size))
    np.testing.assert_allclose(np.asarray(y), np.asarray(y_ref), rtol=0, atol=0)

    # A realistic StyleGAN-sized check (channel=512 -> D=8192, lane-dense multiple of 128).
    mod2 = ConstantInput(512, size=4, key=k_param2)
    x2 = jnp.zeros((16, 512), dtype=jnp.float32)
    y2 = jax.block_until_ready(mod2(x2))
    assert y2.shape == (16, 512, 4, 4), y2.shape
    np.testing.assert_allclose(
        np.asarray(y2), np.asarray(jnp.broadcast_to(mod2.input, (16, 512, 4, 4))),
        rtol=0, atol=0)

    print("KERNEL_OK")
</pallas_src>

<mosaic_0001>
module attributes {stable_mosaic.version = 11 : i64} {
  func.func @_const_input_kernel(%arg0: i32, %arg1: memref<1x64xf32, #tpu.memory_space<vmem>>, %arg2: memref<2x64xf32, #tpu.memory_space<vmem>>) attributes {dimension_semantics = [#tpu.dimension_semantics<parallel>], iteration_bounds = array<i64: 1>, scalar_prefetch = 0 : i64, scratch_operands = 0 : i64, tpu.core_type = #tpu.core_type<tc>, window_params = [{pipeline_mode = #tpu.pipeline_mode<synchronous>, transform_indices = @transform_0, window_bounds = array<i64: 1, 64>}, {transform_indices = @transform_1, window_bounds = array<i64: 2, 64>}]} {
    %c0 = arith.constant 0 : index
    %c0_0 = arith.constant 0 : index
    %0 = vector.load %arg1[%c0, %c0_0] : memref<1x64xf32, #tpu.memory_space<vmem>>, vector<1x64xf32>
    %1 = vector.shape_cast %0 : vector<1x64xf32> to vector<1x64xf32>
    %2 = vector.broadcast %1 : vector<1x64xf32> to vector<2x64xf32>
    %c0_1 = arith.constant 0 : index
    %c0_2 = arith.constant 0 : index
    %3 = vector.load %arg2[%c0_1, %c0_2] : memref<2x64xf32, #tpu.memory_space<vmem>>, vector<2x64xf32>
    tpu.vector_store %arg2[%c0_1, %c0_2], %2 {strides = array<i32>} : memref<2x64xf32, #tpu.memory_space<vmem>>, vector<2x64xf32>,
    return
  }
  func.func @transform_0(%arg0: i32) -> (i32, i32) {
    %c0_i32 = arith.constant 0 : i32
    %c0_i32_0 = arith.constant 0 : i32
    %c0_i32_1 = arith.constant 0 : i32
    return %c0_i32, %c0_i32_0 : i32, i32
  }
  func.func @transform_1(%arg0: i32) -> (i32, i32) {
    %c0_i32 = arith.constant 0 : i32
    %c0_i32_0 = arith.constant 0 : i32
    return %arg0, %c0_i32 : i32, i32
  }
}

</mosaic_0001>

<llo_original>
// kernel: tpu_custom_call.1
$region0: #{tpu_custom_call.1}
  #allocation0 [shape = 'u32[]', space=smem, size = 0x4, offset = 0x4, fixed_abs, tag = 'smem constant byte address 0x4 - core index']
  #allocation1 [shape = 'u32[72,128]{1,0:T(1,128)}', space=vmem, size = 0x9000, scoped, tag = 'internal scratch']
  %s0 = inlined_call_operand.hbm [shape: f32[1,64], index: 0, kind: input, shape index: {}]
  %s1 = inlined_call_operand.hbm [shape: f32[2,64], index: 1, kind: output, shape index: {}]
  %s2 = sld [smem:[#allocation0]]
  $region18: #{tpu_custom_call.1} parent=0
    _
  %s4 = ssub.s32 1, %s2
  %s5 = scalar_select 0, %s4, %s2
  $region1: #{tpu_custom_call.1} parent=0
    #allocation2 [shape = 'u8[512]{0}', space=vmem, size = 0x400, scoped, tag = 'input window, operand 0, single buffered']
    #allocation3 [shape = 's32[1]{0}', space=sflag, size = 0x4, scoped, tag = 'scoped memory for tpu_custom_call.1']
    #allocation4 [shape = 's32[1]{0}', space=sflag, size = 0x4, scoped, tag = 'scoped memory for tpu_custom_call.1']
    #allocation5 [shape = 'u8[1024]{0}', space=vmem, size = 0x400, scoped, tag = 'output window, operand 0, single buffered']
    %6 = vsyncpa [#allocation3], 0
    %7 = vsyncpa [#allocation4], 0
    // Predicated region
    $region2: #{tpu_custom_call.1} parent=1 // pred_check
      _
    $region3: #{tpu_custom_call.1} parent=1 // pred_check_branch
      %9 = sbr.rel (0) target = $region5
    $region4: #{tpu_custom_call.1} parent=1 // pred_region
      %11 = vsyncadd [#allocation3], 0
      %s13 = sshll.u32 %s0, 4
      %s14 = int_to_ptr.hbm [resolvable:$true] %s13
      %s15 = sshll.u32 [#allocation2], 4
      %s16 = int_to_ptr.vmem [resolvable:$true] %s15
      %18 = dma.hbm_to_vmem [thread:$0]  %s14, 16, %s16, [#allocation3]
    $region5: #{tpu_custom_call.1} parent=1 // pred_fallthru
      _
    // Predicated region
    $region6: #{tpu_custom_call.1} parent=1 // pred_check
      _
    $region7: #{tpu_custom_call.1} parent=1 // pred_check_branch
      %20 = sbr.rel (0) target = $region9
    $region8: #{tpu_custom_call.1} parent=1 // pred_region
      %22 = dma.done [#allocation3], 16
    $region9: #{tpu_custom_call.1} parent=1 // pred_fallthru
      _
    %v23 = vld [vmem:[#allocation2] sm:$0x1]
    %v25 = vperm.slane %v23, 0
    %vm27 = vcmask 517120
    %28 = vst.msk [vmem:[#allocation5] sm:$0x3] %vm27, %v25
    // Predicated region
    $region10: #{tpu_custom_call.1} parent=1 // pred_check
      _
    $region11: #{tpu_custom_call.1} parent=1 // pred_check_branch
      %30 = sbr.rel (0) target = $region13
    $region12: #{tpu_custom_call.1} parent=1 // pred_region
      %32 = vsyncadd [#allocation4], 0
      %s34 = sshll.u32 [#allocation5], 4
      %s35 = int_to_ptr.vmem [resolvable:$true] %s34
      %s36 = sshll.u32 %s1, 4
      %s37 = int_to_ptr.hbm [resolvable:$true] %s36
      %39 = dma.vmem_to_hbm [thread:$0]  %s35, 32, %s37, [#allocation4]
    $region13: #{tpu_custom_call.1} parent=1 // pred_fallthru
      _
    // Predicated region
    $region14: #{tpu_custom_call.1} parent=1 // pred_check
      _
    $region15: #{tpu_custom_call.1} parent=1 // pred_check_branch
      %41 = sbr.rel (0) target = $region17
    $region16: #{tpu_custom_call.1} parent=1 // pred_region
      %43 = dma.done [#allocation4], 32
    $region17: #{tpu_custom_call.1} parent=1 // pred_fallthru
      _
    %44 = vsyncpa [#allocation3], 1
    %45 = vsyncpa [#allocation4], 1

</llo_original>
